<compile_context>
chip_gen: v5e
topology: v5e:2x2
jax: 0.10.0
libtpu: 0.0.40
codegen_flags: <defaults>
</compile_context>

<pallas_src>
import re

import jax
import jax.numpy as jnp
from jax.experimental import pallas as pl
from jax.experimental.pallas import tpu as pltpu


def _h_sigmoid_kernel(x_ref, o_ref):
    x = x_ref[...]
    # relu6(x + 3) / 6 — add, max, min, div: compute is invisible (HBM-bound).
    o_ref[...] = (jnp.clip(x + 3.0, 0.0, 6.0) / 6.0).astype(o_ref.dtype)


def _sublane_multiple(dtype) -> int:
    # Packed sublane count: 8 for 32-bit, 16 for bf16/f16.
    itemsize = jnp.dtype(dtype).itemsize
    return max(8, 32 // itemsize)


def _tpu_generation():
    """Best-effort TPU generation (5, 6, 7, ...) from device_kind; None if unknown."""
    try:
        kind = str(jax.devices()[0].device_kind)
        m = re.search(r"(\d+)", kind)
        return int(m.group(1)) if m else None
    except Exception:  # pragma: no cover - defensive
        return None


def h_sigmoid(
    x: jax.Array,
    *,
    target_block_bytes: int | None = None,     # None -> per-generation default
    small_input_bypass_bytes: int = 512 << 10, # tiny activations: let XLA fuse
    donate_input: bool = False,                # set True iff caller donates x
) -> jax.Array:
    """Elementwise hard-sigmoid relu6(x+3)/6. Works for any shape."""
    if not jnp.issubdtype(jnp.dtype(x.dtype), jnp.floating):
        raise TypeError(
            f"h_sigmoid expects a floating dtype, got {x.dtype}; quantized "
            "inputs need scale handling outside this kernel.")

    orig_shape = x.shape
    total = x.size
    itemsize = jnp.dtype(x.dtype).itemsize

    if total == 0:
        return x

    # Small activations (the common BlazePose case): launch/pipeline overhead
    # dwarfs the work and a standalone kernel blocks XLA from fusing into the
    # neighbouring conv.  Pure-JAX path is the real-world win here.
    if total * itemsize <= small_input_bypass_bytes:
        return jnp.clip(x + 3.0, 0.0, 6.0) / 6.0

    # ---- per-generation block sizing ----
    gen = _tpu_generation()
    if target_block_bytes is None:
        # v7x: ~3.2 TB/s makes the ~0.35 us/step overhead a ~25% tax at 2 MiB
        # blocks -> use ~6 MiB.  v5e/v6e: 2 MiB already ~85% of roofline and
        # stays under the 16/32 MiB scoped-VMEM defaults without any flags.
        target_block_bytes = (6 << 20) if (gen is not None and gen >= 7) else (2 << 20)
    # Safety clamp: 8 MiB blocks -> 32 MiB resident (2 bufs x in + 2 x out),
    # which still fits v7x's 64 MiB physical VMEM with the explicit limit bump.
    target_block_bytes = min(target_block_bytes, 8 << 20)

    # ---- choose a lane-dense 2D layout (rows, cols); pad if needed ----
    cols, pad = None, 0
    for cand in (8192, 4096, 2048, 1024, 512, 256, 128):
        if total % cand == 0:
            cols = cand
            break
    if cols is None:
        # Not a multiple of 128: pad the flattened array so every store is a
        # full-width (unmasked) vst, then slice the tail off afterwards.
        cols = 1024 if total >= 1024 else 128
        pad = (-total) % cols
    padded_total = total + pad
    rows = padded_total // cols

    x2 = x.reshape(-1)
    if pad:
        x2 = jnp.pad(x2, (0, pad))
    x2 = x2.reshape(rows, cols)

    # ---- choose block rows: large, sublane-aligned, VMEM-safe ----
    sub = _sublane_multiple(x.dtype)
    rows_per_block = max(1, target_block_bytes // (cols * itemsize))
    block_rows = max(sub, (rows_per_block // sub) * sub)
    block_rows = min(block_rows, rows)

    # v7x has 2 TensorCores: make sure the "parallel" axis has >= 2 grid steps
    # to shard, even when the whole tensor would fit in a single block.
    if (gen is None or gen >= 7) and rows > sub and block_rows >= rows:
        half = (rows + 1) // 2
        block_rows = max(sub, (half // sub) * sub)

    if block_rows < rows:
        # Keep sublane-aligned tiles when actually tiling.
        block_rows = max(sub, (block_rows // sub) * sub)

    block_bytes = block_rows * cols * itemsize
    resident = 4 * block_bytes  # 2 pipeline buffers x (input + output)
    # Raise the scoped-VMEM limit only when the default (16 MiB v5e) would be
    # tight; on v7x's 6 MiB blocks this lands at ~40 MiB (< 64 MiB physical).
    vmem_limit = (resident + (16 << 20)) if resident > (12 << 20) else None

    grid = (pl.cdiv(rows, block_rows),)

    extra_kwargs = {}
    if donate_input:
        # Free HBM-footprint win when the caller donates x at its jit boundary.
        extra_kwargs["input_output_aliases"] = {0: 0}

    out = pl.pallas_call(
        _h_sigmoid_kernel,
        out_shape=jax.ShapeDtypeStruct((rows, cols), x.dtype),
        grid=grid,
        in_specs=[pl.BlockSpec((block_rows, cols), lambda i: (i, 0))],
        out_specs=pl.BlockSpec((block_rows, cols), lambda i: (i, 0)),
        compiler_params=pltpu.CompilerParams(
            dimension_semantics=("parallel",),
            vmem_limit_bytes=vmem_limit,
        ),
        cost_estimate=pl.CostEstimate(
            flops=4 * padded_total,
            transcendentals=0,
            bytes_accessed=2 * padded_total * itemsize,
        ),
        **extra_kwargs,
    )(x2)

    if pad:
        out = out.reshape(-1)[:total]
    return out.reshape(orig_shape)


if __name__ == "__main__":
    key = jax.random.PRNGKey(0)
    k1, k2, k3 = jax.random.split(key, 3)

    # Small NCHW activation consistent with BlazePose usage.
    # Default call -> small-input bypass (XLA-fused elementwise path).
    x_small = jax.random.normal(k1, (2, 4, 16, 16), dtype=jnp.float32) * 4.0
    y_small = jax.block_until_ready(h_sigmoid(x_small))

    # Same small input forced through the Pallas path (128-divisible layout).
    y_small_pallas = jax.block_until_ready(
        h_sigmoid(x_small, small_input_bypass_bytes=0))

    # Medium tensor (2 MiB) exercises the Pallas path with default settings.
    x_med = jax.random.normal(k2, (2, 64, 64, 64), dtype=jnp.float32) * 4.0
    y_med = jax.block_until_ready(h_sigmoid(x_med))

    # Awkward (non-128-divisible) shape forced through the pad+slice path.
    x_odd = jax.random.normal(k3, (2, 3, 17, 19), dtype=jnp.float32) * 4.0
    y_odd = jax.block_until_ready(h_sigmoid(x_odd, small_input_bypass_bytes=0))

    def ref(v):
        return jnp.clip(v + 3.0, 0.0, 6.0) / 6.0

    for got, inp in ((y_small, x_small), (y_small_pallas, x_small),
                     (y_med, x_med), (y_odd, x_odd)):
        assert got.shape == inp.shape and got.dtype == inp.dtype
        assert jnp.max(jnp.abs(got - ref(inp))) < 1e-6

    print("KERNEL_OK")
</pallas_src>

<mosaic_0001>
module attributes {stable_mosaic.version = 11 : i64} {
  func.func @_h_sigmoid_kernel(%arg0: i32, %arg1: memref<1x2048xf32, #tpu.memory_space<vmem>>, %arg2: memref<1x2048xf32, #tpu.memory_space<vmem>>) attributes {dimension_semantics = [#tpu.dimension_semantics<parallel>], iteration_bounds = array<i64: 1>, scalar_prefetch = 0 : i64, scratch_operands = 0 : i64, tpu.core_type = #tpu.core_type<tc>, window_params = [{transform_indices = @transform_0, window_bounds = array<i64: 1, 2048>}, {transform_indices = @transform_1, window_bounds = array<i64: 1, 2048>}]} {
    %c0 = arith.constant 0 : index
    %c0_0 = arith.constant 0 : index
    %0 = vector.load %arg1[%c0, %c0_0] : memref<1x2048xf32, #tpu.memory_space<vmem>>, vector<1x2048xf32>
    %cst = arith.constant 3.000000e+00 : f32
    %1 = vector.broadcast %cst : f32 to vector<1x2048xf32>
    %2 = arith.addf %0, %1 : vector<1x2048xf32>
    %cst_1 = arith.constant 0.000000e+00 : f32
    %cst_2 = arith.constant 6.000000e+00 : f32
    %3 = vector.broadcast %cst_1 : f32 to vector<1x2048xf32>
    %4 = arith.maximumf %3, %2 : vector<1x2048xf32>
    %5 = vector.broadcast %cst_2 : f32 to vector<1x2048xf32>
    %6 = arith.minimumf %5, %4 : vector<1x2048xf32>
    %cst_3 = arith.constant 6.000000e+00 : f32
    %7 = vector.broadcast %cst_3 : f32 to vector<1x2048xf32>
    %8 = arith.divf %6, %7 : vector<1x2048xf32>
    %c0_4 = arith.constant 0 : index
    %c0_5 = arith.constant 0 : index
    %9 = vector.load %arg2[%c0_4, %c0_5] : memref<1x2048xf32, #tpu.memory_space<vmem>>, vector<1x2048xf32>
    tpu.vector_store %arg2[%c0_4, %c0_5], %8 {strides = array<i32>} : memref<1x2048xf32, #tpu.memory_space<vmem>>, vector<1x2048xf32>,
    return
  }
  func.func @transform_0(%arg0: i32) -> (i32, i32) {
    %c0_i32 = arith.constant 0 : i32
    %c0_i32_0 = arith.constant 0 : i32
    return %arg0, %c0_i32 : i32, i32
  }
  func.func @transform_1(%arg0: i32) -> (i32, i32) {
    %c0_i32 = arith.constant 0 : i32
    %c0_i32_0 = arith.constant 0 : i32
    return %arg0, %c0_i32 : i32, i32
  }
}

</mosaic_0001>

<llo_original>
// kernel: tpu_custom_call.1
$region0: #{tpu_custom_call.1}
  #allocation0 [shape = 'u32[]', space=smem, size = 0x4, offset = 0x4, fixed_abs, tag = 'smem constant byte address 0x4 - core index']
  #allocation1 [shape = 'u32[72,128]{1,0:T(1,128)}', space=vmem, size = 0x9000, scoped, tag = 'internal scratch']
  %s0 = inlined_call_operand.hbm [shape: f32[1,2048], index: 0, kind: input, shape index: {}]
  %s1 = inlined_call_operand.hbm [shape: f32[1,2048], index: 1, kind: output, shape index: {}]
  %s2 = sld [smem:[#allocation0]]
  $region18: #{tpu_custom_call.1} parent=0
    _
  %s4 = ssub.s32 1, %s2
  %s5 = scalar_select 0, %s4, %s2
  $region1: #{tpu_custom_call.1} parent=0
    #allocation2 [shape = 'u8[8192]{0}', space=vmem, size = 0x2000, scoped, tag = 'input window, operand 0, single buffered']
    #allocation3 [shape = 's32[1]{0}', space=sflag, size = 0x4, scoped, tag = 'scoped memory for tpu_custom_call.1']
    #allocation4 [shape = 's32[1]{0}', space=sflag, size = 0x4, scoped, tag = 'scoped memory for tpu_custom_call.1']
    #allocation5 [shape = 'u8[8192]{0}', space=vmem, size = 0x2000, scoped, tag = 'output window, operand 0, single buffered']
    %6 = vsyncpa [#allocation3], 0
    %7 = vsyncpa [#allocation4], 0
    // Predicated region
    $region2: #{tpu_custom_call.1} parent=1 // pred_check
      _
    $region3: #{tpu_custom_call.1} parent=1 // pred_check_branch
      %9 = sbr.rel (0) target = $region5
    $region4: #{tpu_custom_call.1} parent=1 // pred_region
      %11 = vsyncadd [#allocation3], 0
      %s13 = sshll.u32 %s0, 4
      %s14 = int_to_ptr.hbm [resolvable:$true] %s13
      %s15 = sshll.u32 [#allocation2], 4
      %s16 = int_to_ptr.vmem [resolvable:$true] %s15
      %18 = dma.hbm_to_vmem [thread:$0]  %s14, 256, %s16, [#allocation3]
    $region5: #{tpu_custom_call.1} parent=1 // pred_fallthru
      _
    // Predicated region
    $region6: #{tpu_custom_call.1} parent=1 // pred_check
      _
    $region7: #{tpu_custom_call.1} parent=1 // pred_check_branch
      %20 = sbr.rel (0) target = $region9
    $region8: #{tpu_custom_call.1} parent=1 // pred_region
      %22 = dma.done [#allocation3], 256
    $region9: #{tpu_custom_call.1} parent=1 // pred_fallthru
      _
    %v23 = vld [vmem:[#allocation2] sm:$0xff]
    %v24 = vld [vmem:[#allocation2 + $0x8] sm:$0xff]
    %v25 = vadd.f32 %v23, 3.0
    %v26 = vadd.f32 %v24, 3.0
    %v27 = vmax.f32 %v25, 0.0
    %v28 = vmax.f32 %v26, 0.0
    %v29 = vmin.f32 %v27, 6.0
    %v30 = vmin.f32 %v28, 6.0
    %v31 = vrcp.pop 6.0
    %v32 = vmul.f32 6.0, %v31
    %v33 = vsub.f32 1.0, %v32
    %v34 = vmul.f32 %v31, %v33
    %v35 = vadd.f32 %v31, %v34
    %vm36 = vweird.f32 %v31
    %v37 = vsel %vm36, %v31, %v35
    %v38 = vmul.f32 %v29, %v37
    %v39 = vmul.f32 %v30, %v37
    %40 = vst [vmem:[#allocation5] sm:$0xff] %v38
    %41 = vst [vmem:[#allocation5 + $0x8] sm:$0xff] %v39
    // Predicated region
    $region10: #{tpu_custom_call.1} parent=1 // pred_check
      _
    $region11: #{tpu_custom_call.1} parent=1 // pred_check_branch
      %43 = sbr.rel (0) target = $region13
    $region12: #{tpu_custom_call.1} parent=1 // pred_region
      %45 = vsyncadd [#allocation4], 0
      %s47 = sshll.u32 [#allocation5], 4
      %s48 = int_to_ptr.vmem [resolvable:$true] %s47
      %s49 = sshll.u32 %s1, 4
      %s50 = int_to_ptr.hbm [resolvable:$true] %s49
      %52 = dma.vmem_to_hbm [thread:$0]  %s48, 256, %s50, [#allocation4]
    $region13: #{tpu_custom_call.1} parent=1 // pred_fallthru
      _
    // Predicated region
    $region14: #{tpu_custom_call.1} parent=1 // pred_check
      _
    $region15: #{tpu_custom_call.1} parent=1 // pred_check_branch
      %54 = sbr.rel (0) target = $region17
    $region16: #{tpu_custom_call.1} parent=1 // pred_region
      %56 = dma.done [#allocation4], 256
    $region17: #{tpu_custom_call.1} parent=1 // pred_fallthru
      _
    %57 = vsyncpa [#allocation3], 1
    %58 = vsyncpa [#allocation4], 1

</llo_original>
